<compile_context>
chip_gen: v6e
topology: v6e:2x2x1
jax: 0.10.0
libtpu: 0.0.40
codegen_flags: <defaults>
</compile_context>

<pallas_src>
import functools
import math

import jax
import jax.numpy as jnp
from jax import lax
from jax.experimental import pallas as pl
from jax.experimental.pallas import tpu as pltpu


def _atc_loss_kernel(temp_ref, audio_ref, text_ref, out_ref,
                     colmax_ref, colsum_ref,
                     lse_acc_ref, diag_acc_ref, aabs_acc_ref, asq_acc_ref,
                     *, tile_b, batch, embed_dim, embed_regularization):
    i = pl.program_id(0)

    @pl.when(i == 0)
    def _init():
        colmax_ref[...] = jnp.full_like(colmax_ref, -jnp.inf)
        colsum_ref[...] = jnp.zeros_like(colsum_ref)
        lse_acc_ref[...] = jnp.zeros_like(lse_acc_ref)
        diag_acc_ref[...] = jnp.zeros_like(diag_acc_ref)
        aabs_acc_ref[...] = jnp.zeros_like(aabs_acc_ref)
        asq_acc_ref[...] = jnp.zeros_like(asq_acc_ref)

    a = audio_ref[...]                      # [tile_b, D], native dtype (bf16 ok)
    t = text_ref[...]                       # [B, D],      native dtype
    scale = jnp.exp(temp_ref[0])            # parameter stores log(1/temperature)

    # Single MXU matmul for this row tile; contraction on dim 1 of both
    # operands -> no transpose of `t` is materialized.  f32 accumulation.
    sim = scale * lax.dot_general(
        a, t, dimension_numbers=(((1,), (1,)), ((), ())),
        preferred_element_type=jnp.float32)                      # [tile_b, B] f32

    # ---- a2t: row-wise logsumexp (each row is complete inside the tile) ----
    row_max = jnp.max(sim, axis=1, keepdims=True)
    row_lse = jnp.log(jnp.sum(jnp.exp(sim - row_max), axis=1,
                              keepdims=True)) + row_max          # [tile_b, 1]

    # ---- diagonal of sim_a2t (identical to the diagonal of sim_t2a) --------
    rows = i * tile_b + lax.broadcasted_iota(jnp.int32, (tile_b, batch), 0)
    cols = lax.broadcasted_iota(jnp.int32, (tile_b, batch), 1)
    diag = jnp.sum(jnp.where(rows == cols, sim, 0.0),
                   axis=1, keepdims=True)                        # [tile_b, 1]

    # ---- t2a: online column-wise logsumexp carried across row tiles --------
    old_cmax = colmax_ref[...]
    new_cmax = jnp.maximum(old_cmax, jnp.max(sim, axis=0, keepdims=True))
    colsum_ref[...] = (colsum_ref[...] * jnp.exp(old_cmax - new_cmax)
                       + jnp.sum(jnp.exp(sim - new_cmax), axis=0, keepdims=True))
    colmax_ref[...] = new_cmax

    # ---- scalar accumulators (kept as [1, 1] VMEM values) -------------------
    a32 = a.astype(jnp.float32)
    lse_acc_ref[...] += jnp.sum(row_lse, keepdims=True)
    diag_acc_ref[...] += jnp.sum(diag, keepdims=True)
    aabs_acc_ref[...] += jnp.sum(jnp.abs(a32), keepdims=True)
    asq_acc_ref[...] += jnp.sum(a32 * a32, keepdims=True)

    @pl.when(i == pl.num_programs(0) - 1)
    def _finalize():
        lse_cols = jnp.log(colsum_ref[...]) + colmax_ref[...]    # [1, B]
        sum_diag = diag_acc_ref[...]                             # [1, 1]
        inv_b = 1.0 / batch
        loss_a2t = (lse_acc_ref[...] - sum_diag) * inv_b
        loss_t2a = (jnp.sum(lse_cols, keepdims=True) - sum_diag) * inv_b
        loss = 0.5 * (loss_a2t + loss_t2a)
        if embed_regularization:
            t32 = t.astype(jnp.float32)
            inv_n = 1.0 / (batch * embed_dim)
            reg_a = (aabs_acc_ref[...] * inv_n) * lax.rsqrt(asq_acc_ref[...])
            reg_t = (jnp.sum(jnp.abs(t32), keepdims=True) * inv_n) \
                    * lax.rsqrt(jnp.sum(t32 * t32, keepdims=True))
            loss = loss + reg_a + reg_t
        out_ref[...] = loss


def _pick_row_tile(batch):
    for tb in (512, 256, 128):
        if batch % tb == 0:
            return tb
    return batch  # small / odd batch: single full-size tile


def audio_text_contrastive_loss(audio_embed, text_embed, temp_log,
                                embed_regularization=True, row_tile=None):
    """audio_embed, text_embed: [B, D]; temp_log: [1] f32 = log(1/temperature)."""
    B, D = audio_embed.shape
    assert text_embed.shape == (B, D)
    tb = row_tile if row_tile is not None else _pick_row_tile(B)
    assert B % tb == 0, "row tile must divide the batch"
    n_tiles = B // tb

    kernel = functools.partial(
        _atc_loss_kernel, tile_b=tb, batch=B, embed_dim=D,
        embed_regularization=embed_regularization)

    itemsize = jnp.dtype(audio_embed.dtype).itemsize
    cost = pl.CostEstimate(
        flops=2 * B * B * D,                 # single matmul
        transcendentals=2 * B * B,           # exp for row/col softmax terms
        bytes_accessed=B * D * itemsize + n_tiles * B * D * itemsize + 4)

    # Raise the scoped VMEM limit only when the tiles actually need it.
    est_vmem_bytes = 2 * (tb + B) * D * itemsize + 8 * tb * B + 8 * B + 1024
    cp_kwargs = dict(dimension_semantics=("arbitrary",))
    if est_vmem_bytes > 28 * 1024 * 1024:
        cp_kwargs["vmem_limit_bytes"] = int(min(1.5 * est_vmem_bytes,
                                                100 * 1024 * 1024))

    out = pl.pallas_call(
        kernel,
        out_shape=jax.ShapeDtypeStruct((1, 1), jnp.float32),
        grid=(n_tiles,),
        in_specs=[
            pl.BlockSpec(memory_space=pltpu.SMEM),            # temperature scalar
            pl.BlockSpec((tb, D), lambda i: (i, 0)),          # audio row tile
            pl.BlockSpec((B, D), lambda i: (0, 0)),           # full text (resident)
        ],
        out_specs=pl.BlockSpec((1, 1), lambda i: (0, 0)),
        scratch_shapes=[
            pltpu.VMEM((1, B), jnp.float32),   # running column max
            pltpu.VMEM((1, B), jnp.float32),   # running column exp-sum
            pltpu.VMEM((1, 1), jnp.float32),   # sum of row LSEs
            pltpu.VMEM((1, 1), jnp.float32),   # sum of diagonal sims
            pltpu.VMEM((1, 1), jnp.float32),   # sum |audio|
            pltpu.VMEM((1, 1), jnp.float32),   # sum audio^2
        ],
        compiler_params=pltpu.CompilerParams(**cp_kwargs),
        cost_estimate=cost,
    )(temp_log, audio_embed, text_embed)
    return out[0, 0]


def _reference_loss(audio_embed, text_embed, temp_log, embed_regularization=True):
    a = audio_embed.astype(jnp.float32)
    t = text_embed.astype(jnp.float32)
    scale = jnp.exp(temp_log[0])
    sim_a2t = scale * a @ t.T
    sim_t2a = scale * t @ a.T
    tgt = jnp.eye(a.shape[0], dtype=jnp.float32)
    loss_a2t = -jnp.mean(jnp.sum(jax.nn.log_softmax(sim_a2t, axis=1) * tgt, axis=1))
    loss_t2a = -jnp.mean(jnp.sum(jax.nn.log_softmax(sim_t2a, axis=1) * tgt, axis=1))
    loss = 0.5 * (loss_a2t + loss_t2a)
    if embed_regularization:
        loss = loss + jnp.mean(jnp.abs(a)) / jnp.sqrt(jnp.sum(a ** 2)) \
                    + jnp.mean(jnp.abs(t)) / jnp.sqrt(jnp.sum(t ** 2))
    return loss


if __name__ == "__main__":
    key = jax.random.PRNGKey(0)
    k_a, k_t, k_a2, k_t2 = jax.random.split(key, 4)

    temperature = 0.07
    temp_log = jnp.array([math.log(1.0 / temperature)], dtype=jnp.float32)

    # Case 1: single row tile (tile == batch).
    B, D = 8, 32
    audio = jax.random.normal(k_a, (B, D), dtype=jnp.float32)
    text = jax.random.normal(k_t, (B, D), dtype=jnp.float32)
    loss = jax.block_until_ready(
        audio_text_contrastive_loss(audio, text, temp_log, True))
    ref = _reference_loss(audio, text, temp_log, True)
    assert jnp.allclose(loss, ref, rtol=1e-5, atol=1e-5), (loss, ref)

    # Case 2: two row tiles — exercises the online column-LSE carry across
    # grid steps and the accumulator init/finalize path.
    B2, D2 = 16, 32
    audio2 = jax.random.normal(k_a2, (B2, D2), dtype=jnp.float32)
    text2 = jax.random.normal(k_t2, (B2, D2), dtype=jnp.float32)
    loss2 = jax.block_until_ready(
        audio_text_contrastive_loss(audio2, text2, temp_log, True, row_tile=8))
    ref2 = _reference_loss(audio2, text2, temp_log, True)
    assert jnp.allclose(loss2, ref2, rtol=1e-5, atol=1e-5), (loss2, ref2)

    print("KERNEL_OK")
</pallas_src>

<mosaic_0001>
module attributes {stable_mosaic.version = 11 : i64} {
  func.func @_atc_loss_kernel(%arg0: i32, %arg1: memref<1xf32, #tpu.memory_space<smem>>, %arg2: memref<8x32xf32, #tpu.memory_space<vmem>>, %arg3: memref<8x32xf32, #tpu.memory_space<vmem>>, %arg4: memref<1x1xf32, #tpu.memory_space<vmem>>, %arg5: memref<1x8xf32, #tpu.memory_space<vmem>>, %arg6: memref<1x8xf32, #tpu.memory_space<vmem>>, %arg7: memref<1x1xf32, #tpu.memory_space<vmem>>, %arg8: memref<1x1xf32, #tpu.memory_space<vmem>>, %arg9: memref<1x1xf32, #tpu.memory_space<vmem>>, %arg10: memref<1x1xf32, #tpu.memory_space<vmem>>) attributes {dimension_semantics = [#tpu.dimension_semantics<arbitrary>], iteration_bounds = array<i64: 1>, scalar_prefetch = 0 : i64, scratch_operands = 6 : i64, tpu.core_type = #tpu.core_type<tc>, window_params = [{transform_indices = @transform_0, window_bounds = array<i64: 1>}, {transform_indices = @transform_1, window_bounds = array<i64: 8, 32>}, {pipeline_mode = #tpu.pipeline_mode<synchronous>, transform_indices = @transform_2, window_bounds = array<i64: 8, 32>}, {pipeline_mode = #tpu.pipeline_mode<synchronous>, transform_indices = @transform_3, window_bounds = array<i64: 1, 1>}]} {
    %c0_i32 = arith.constant 0 : i32
    %0 = arith.cmpi eq, %arg0, %c0_i32 : i32
    %1 = arith.extui %0 : i1 to i32
    %c0_i32_0 = arith.constant 0 : i32
    %2 = arith.cmpi ne, %1, %c0_i32_0 : i32
    scf.if %2 {
      %cst_41 = arith.constant 0xFF800000 : f32
      %82 = vector.broadcast %cst_41 : f32 to vector<1x8xf32>
      %c0_42 = arith.constant 0 : index
      %c0_43 = arith.constant 0 : index
      %83 = vector.load %arg5[%c0_42, %c0_43] : memref<1x8xf32, #tpu.memory_space<vmem>>, vector<1x8xf32>
      tpu.vector_store %arg5[%c0_42, %c0_43], %82 {strides = array<i32>} : memref<1x8xf32, #tpu.memory_space<vmem>>, vector<1x8xf32>,
      %cst_44 = arith.constant 0.000000e+00 : f32
      %84 = vector.broadcast %cst_44 : f32 to vector<1x8xf32>
      %c0_45 = arith.constant 0 : index
      %c0_46 = arith.constant 0 : index
      %85 = vector.load %arg6[%c0_45, %c0_46] : memref<1x8xf32, #tpu.memory_space<vmem>>, vector<1x8xf32>
      tpu.vector_store %arg6[%c0_45, %c0_46], %84 {strides = array<i32>} : memref<1x8xf32, #tpu.memory_space<vmem>>, vector<1x8xf32>,
      %cst_47 = arith.constant 0.000000e+00 : f32
      %86 = vector.broadcast %cst_47 : f32 to vector<1x1xf32>
      %c0_48 = arith.constant 0 : index
      %c0_49 = arith.constant 0 : index
      %87 = vector.load %arg7[%c0_48, %c0_49] : memref<1x1xf32, #tpu.memory_space<vmem>>, vector<1x1xf32>
      tpu.vector_store %arg7[%c0_48, %c0_49], %86 {strides = array<i32>} : memref<1x1xf32, #tpu.memory_space<vmem>>, vector<1x1xf32>,
      %cst_50 = arith.constant 0.000000e+00 : f32
      %88 = vector.broadcast %cst_50 : f32 to vector<1x1xf32>
      %c0_51 = arith.constant 0 : index
      %c0_52 = arith.constant 0 : index
      %89 = vector.load %arg8[%c0_51, %c0_52] : memref<1x1xf32, #tpu.memory_space<vmem>>, vector<1x1xf32>
      tpu.vector_store %arg8[%c0_51, %c0_52], %88 {strides = array<i32>} : memref<1x1xf32, #tpu.memory_space<vmem>>, vector<1x1xf32>,
      %cst_53 = arith.constant 0.000000e+00 : f32
      %90 = vector.broadcast %cst_53 : f32 to vector<1x1xf32>
      %c0_54 = arith.constant 0 : index
      %c0_55 = arith.constant 0 : index
      %91 = vector.load %arg9[%c0_54, %c0_55] : memref<1x1xf32, #tpu.memory_space<vmem>>, vector<1x1xf32>
      tpu.vector_store %arg9[%c0_54, %c0_55], %90 {strides = array<i32>} : memref<1x1xf32, #tpu.memory_space<vmem>>, vector<1x1xf32>,
      %cst_56 = arith.constant 0.000000e+00 : f32
      %92 = vector.broadcast %cst_56 : f32 to vector<1x1xf32>
      %c0_57 = arith.constant 0 : index
      %c0_58 = arith.constant 0 : index
      %93 = vector.load %arg10[%c0_57, %c0_58] : memref<1x1xf32, #tpu.memory_space<vmem>>, vector<1x1xf32>
      tpu.vector_store %arg10[%c0_57, %c0_58], %92 {strides = array<i32>} : memref<1x1xf32, #tpu.memory_space<vmem>>, vector<1x1xf32>,
    } else {
    }
    %c0 = arith.constant 0 : index
    %c0_1 = arith.constant 0 : index
    %3 = vector.load %arg2[%c0, %c0_1] : memref<8x32xf32, #tpu.memory_space<vmem>>, vector<8x32xf32>
    %c0_2 = arith.constant 0 : index
    %c0_3 = arith.constant 0 : index
    %4 = vector.load %arg3[%c0_2, %c0_3] : memref<8x32xf32, #tpu.memory_space<vmem>>, vector<8x32xf32>
    %c0_4 = arith.constant 0 : index
    %5 = memref.load %arg1[%c0_4] : memref<1xf32, #tpu.memory_space<smem>>
    %6 = math.exp %5 : f32
    %cst = arith.constant dense<0.000000e+00> : vector<8x8xf32>
    %7 = tpu.matmul %3, %4, %cst {dimension_numbers = #tpu.dot_dimension_numbers<[1], [1], [0], [0], [0, 0, 1, 0], [], []>} : vector<8x32xf32>, vector<8x32xf32>, vector<8x8xf32> -> vector<8x8xf32>
    %8 = vector.broadcast %6 : f32 to vector<8x8xf32>
    %9 = arith.mulf %8, %7 : vector<8x8xf32>
    %cst_5 = arith.constant dense<0xFF800000> : vector<8xf32>
    %10 = vector.multi_reduction <maximumf>, %9, %cst_5 [1] : vector<8x8xf32> to vector<8xf32>
    %11 = vector.shape_cast %10 : vector<8xf32> to vector<8x1xf32>
    %12 = vector.broadcast %11 : vector<8x1xf32> to vector<8x8xf32>
    %13 = arith.subf %9, %12 : vector<8x8xf32>
    %14 = math.exp %13 : vector<8x8xf32>
    %cst_6 = arith.constant dense<0.000000e+00> : vector<8xf32>
    %15 = vector.multi_reduction <add>, %14, %cst_6 [1] : vector<8x8xf32> to vector<8xf32>
    %16 = vector.shape_cast %15 : vector<8xf32> to vector<8x1xf32>
    %17 = math.log %16 : vector<8x1xf32>
    %18 = arith.addf %17, %11 : vector<8x1xf32>
    %c8_i32 = arith.constant 8 : i32
    %19 = arith.muli %arg0, %c8_i32 : i32
    %20 = tpu.iota {dimensions = array<i32: 0>} : vector<8x8xi32>
    %21 = vector.broadcast %19 : i32 to vector<8x8xi32>
    %22 = arith.addi %21, %20 : vector<8x8xi32>
    %23 = tpu.iota {dimensions = array<i32: 1>} : vector<8x8xi32>
    %24 = arith.cmpi eq, %22, %23 : vector<8x8xi32>
    %cst_7 = arith.constant 0.000000e+00 : f32
    %25 = vector.broadcast %cst_7 : f32 to vector<8x8xf32>
    %26 = arith.select %24, %9, %25 : vector<8x8xi1>, vector<8x8xf32>
    %cst_8 = arith.constant dense<0.000000e+00> : vector<8xf32>
    %27 = vector.multi_reduction <add>, %26, %cst_8 [1] : vector<8x8xf32> to vector<8xf32>
    %28 = vector.shape_cast %27 : vector<8xf32> to vector<8x1xf32>
    %c0_9 = arith.constant 0 : index
    %c0_10 = arith.constant 0 : index
    %29 = vector.load %arg5[%c0_9, %c0_10] : memref<1x8xf32, #tpu.memory_space<vmem>>, vector<1x8xf32>
    %cst_11 = arith.constant dense<0xFF800000> : vector<8xf32>
    %30 = vector.multi_reduction <maximumf>, %9, %cst_11 [0] : vector<8x8xf32> to vector<8xf32>
    %31 = vector.shape_cast %30 : vector<8xf32> to vector<1x8xf32>
    %32 = arith.maximumf %29, %31 : vector<1x8xf32>
    %c0_12 = arith.constant 0 : index
    %c0_13 = arith.constant 0 : index
    %33 = vector.load %arg6[%c0_12, %c0_13] : memref<1x8xf32, #tpu.memory_space<vmem>>, vector<1x8xf32>
    %34 = arith.subf %29, %32 : vector<1x8xf32>
    %35 = math.exp %34 : vector<1x8xf32>
    %36 = arith.mulf %33, %35 : vector<1x8xf32>
    %37 = vector.broadcast %32 : vector<1x8xf32> to vector<8x8xf32>
    %38 = arith.subf %9, %37 : vector<8x8xf32>
    %39 = math.exp %38 : vector<8x8xf32>
    %cst_14 = arith.constant dense<0.000000e+00> : vector<8xf32>
    %40 = vector.multi_reduction <add>, %39, %cst_14 [0] : vector<8x8xf32> to vector<8xf32>
    %41 = vector.shape_cast %40 : vector<8xf32> to vector<1x8xf32>
    %42 = arith.addf %36, %41 : vector<1x8xf32>
    %c0_15 = arith.constant 0 : index
    %c0_16 = arith.constant 0 : index
    %43 = vector.load %arg6[%c0_15, %c0_16] : memref<1x8xf32, #tpu.memory_space<vmem>>, vector<1x8xf32>
    tpu.vector_store %arg6[%c0_15, %c0_16], %42 {strides = array<i32>} : memref<1x8xf32, #tpu.memory_space<vmem>>, vector<1x8xf32>,
    %c0_17 = arith.constant 0 : index
    %c0_18 = arith.constant 0 : index
    %44 = vector.load %arg5[%c0_17, %c0_18] : memref<1x8xf32, #tpu.memory_space<vmem>>, vector<1x8xf32>
    tpu.vector_store %arg5[%c0_17, %c0_18], %32 {strides = array<i32>} : memref<1x8xf32, #tpu.memory_space<vmem>>, vector<1x8xf32>,
    %c0_19 = arith.constant 0 : index
    %c0_20 = arith.constant 0 : index
    %45 = vector.load %arg7[%c0_19, %c0_20] : memref<1x1xf32, #tpu.memory_space<vmem>>, vector<1x1xf32>
    %46 = vector.shape_cast %18 : vector<8x1xf32> to vector<1x8x1xf32>
    %cst_21 = arith.constant dense<0.000000e+00> : vector<1xf32>
    %47 = vector.multi_reduction <add>, %46, %cst_21 [1, 2] : vector<1x8x1xf32> to vector<1xf32>
    %48 = vector.shape_cast %47 : vector<1xf32> to vector<1x1x1xf32>
    %49 = vector.extract %48[0, 0, 0] : f32 from vector<1x1x1xf32>
    %50 = vector.broadcast %49 : f32 to vector<1x1xf32>
    %51 = arith.addf %45, %50 : vector<1x1xf32>
    %c0_22 = arith.constant 0 : index
    %c0_23 = arith.constant 0 : index
    %52 = vector.load %arg7[%c0_22, %c0_23] : memref<1x1xf32, #tpu.memory_space<vmem>>, vector<1x1xf32>
    tpu.vector_store %arg7[%c0_22, %c0_23], %51 {strides = array<i32>} : memref<1x1xf32, #tpu.memory_space<vmem>>, vector<1x1xf32>,
    %c0_24 = arith.constant 0 : index
    %c0_25 = arith.constant 0 : index
    %53 = vector.load %arg8[%c0_24, %c0_25] : memref<1x1xf32, #tpu.memory_space<vmem>>, vector<1x1xf32>
    %54 = vector.shape_cast %28 : vector<8x1xf32> to vector<1x8x1xf32>
    %cst_26 = arith.constant dense<0.000000e+00> : vector<1xf32>
    %55 = vector.multi_reduction <add>, %54, %cst_26 [1, 2] : vector<1x8x1xf32> to vector<1xf32>
    %56 = vector.shape_cast %55 : vector<1xf32> to vector<1x1x1xf32>
    %57 = vector.extract %56[0, 0, 0] : f32 from vector<1x1x1xf32>
    %58 = vector.broadcast %57 : f32 to vector<1x1xf32>
    %59 = arith.addf %53, %58 : vector<1x1xf32>
    %c0_27 = arith.constant 0 : index
    %c0_28 = arith.constant 0 : index
    %60 = vector.load %arg8[%c0_27, %c0_28] : memref<1x1xf32, #tpu.memory_space<vmem>>, vector<1x1xf32>
    tpu.vector_store %arg8[%c0_27, %c0_28], %59 {strides = array<i32>} : memref<1x1xf32, #tpu.memory_space<vmem>>, vector<1x1xf32>,
    %c0_29 = arith.constant 0 : index
    %c0_30 = arith.constant 0 : index
    %61 = vector.load %arg9[%c0_29, %c0_30] : memref<1x1xf32, #tpu.memory_space<vmem>>, vector<1x1xf32>
    %62 = math.absf %3 : vector<8x32xf32>
    %63 = vector.shape_cast %62 : vector<8x32xf32> to vector<1x8x32xf32>
    %cst_31 = arith.constant dense<0.000000e+00> : vector<1xf32>
    %64 = vector.multi_reduction <add>, %63, %cst_31 [1, 2] : vector<1x8x32xf32> to vector<1xf32>
    %65 = vector.shape_cast %64 : vector<1xf32> to vector<1x1x1xf32>
    %66 = vector.extract %65[0, 0, 0] : f32 from vector<1x1x1xf32>
    %67 = vector.broadcast %66 : f32 to vector<1x1xf32>
    %68 = arith.addf %61, %67 : vector<1x1xf32>
    %c0_32 = arith.constant 0 : index
    %c0_33 = arith.constant 0 : index
    %69 = vector.load %arg9[%c0_32, %c0_33] : memref<1x1xf32, #tpu.memory_space<vmem>>, vector<1x1xf32>
    tpu.vector_store %arg9[%c0_32, %c0_33], %68 {strides = array<i32>} : memref<1x1xf32, #tpu.memory_space<vmem>>, vector<1x1xf32>,
    %c0_34 = arith.constant 0 : index
    %c0_35 = arith.constant 0 : index
    %70 = vector.load %arg10[%c0_34, %c0_35] : memref<1x1xf32, #tpu.memory_space<vmem>>, vector<1x1xf32>
    %71 = arith.mulf %3, %3 : vector<8x32xf32>
    %72 = vector.shape_cast %71 : vector<8x32xf32> to vector<1x8x32xf32>
    %cst_36 = arith.constant dense<0.000000e+00> : vector<1xf32>
    %73 = vector.multi_reduction <add>, %72, %cst_36 [1, 2] : vector<1x8x32xf32> to vector<1xf32>
    %74 = vector.shape_cast %73 : vector<1xf32> to vector<1x1x1xf32>
    %75 = vector.extract %74[0, 0, 0] : f32 from vector<1x1x1xf32>
    %76 = vector.broadcast %75 : f32 to vector<1x1xf32>
    %77 = arith.addf %70, %76 : vector<1x1xf32>
    %c0_37 = arith.constant 0 : index
    %c0_38 = arith.constant 0 : index
    %78 = vector.load %arg10[%c0_37, %c0_38] : memref<1x1xf32, #tpu.memory_space<vmem>>, vector<1x1xf32>
    tpu.vector_store %arg10[%c0_37, %c0_38], %77 {strides = array<i32>} : memref<1x1xf32, #tpu.memory_space<vmem>>, vector<1x1xf32>,
    %c0_i32_39 = arith.constant 0 : i32
    %79 = arith.cmpi eq, %arg0, %c0_i32_39 : i32
    %80 = arith.extui %79 : i1 to i32
    %c0_i32_40 = arith.constant 0 : i32
    %81 = arith.cmpi ne, %80, %c0_i32_40 : i32
    scf.if %81 {
      %c0_41 = arith.constant 0 : index
      %c0_42 = arith.constant 0 : index
      %82 = vector.load %arg6[%c0_41, %c0_42] : memref<1x8xf32, #tpu.memory_space<vmem>>, vector<1x8xf32>
      %83 = math.log %82 : vector<1x8xf32>
      %c0_43 = arith.constant 0 : index
      %c0_44 = arith.constant 0 : index
      %84 = vector.load %arg5[%c0_43, %c0_44] : memref<1x8xf32, #tpu.memory_space<vmem>>, vector<1x8xf32>
      %85 = arith.addf %83, %84 : vector<1x8xf32>
      %c0_45 = arith.constant 0 : index
      %c0_46 = arith.constant 0 : index
      %86 = vector.load %arg8[%c0_45, %c0_46] : memref<1x1xf32, #tpu.memory_space<vmem>>, vector<1x1xf32>
      %c0_47 = arith.constant 0 : index
      %c0_48 = arith.constant 0 : index
      %87 = vector.load %arg7[%c0_47, %c0_48] : memref<1x1xf32, #tpu.memory_space<vmem>>, vector<1x1xf32>
      %88 = arith.subf %87, %86 : vector<1x1xf32>
      %cst_49 = arith.constant 1.250000e-01 : f32
      %89 = vector.broadcast %cst_49 : f32 to vector<1x1xf32>
      %90 = arith.mulf %88, %89 : vector<1x1xf32>
      %91 = vector.shape_cast %85 : vector<1x8xf32> to vector<1x1x8xf32>
      %cst_50 = arith.constant dense<0.000000e+00> : vector<1xf32>
      %92 = vector.multi_reduction <add>, %91, %cst_50 [1, 2] : vector<1x1x8xf32> to vector<1xf32>
      %93 = vector.shape_cast %92 : vector<1xf32> to vector<1x1x1xf32>
      %94 = vector.extract %93[0, 0, 0] : f32 from vector<1x1x1xf32>
      %95 = vector.broadcast %94 : f32 to vector<1x1xf32>
      %96 = arith.subf %95, %86 : vector<1x1xf32>
      %cst_51 = arith.constant 1.250000e-01 : f32
      %97 = vector.broadcast %cst_51 : f32 to vector<1x1xf32>
      %98 = arith.mulf %96, %97 : vector<1x1xf32>
      %99 = arith.addf %90, %98 : vector<1x1xf32>
      %cst_52 = arith.constant 5.000000e-01 : f32
      %100 = vector.broadcast %cst_52 : f32 to vector<1x1xf32>
      %101 = arith.mulf %100, %99 : vector<1x1xf32>
      %c0_53 = arith.constant 0 : index
      %c0_54 = arith.constant 0 : index
      %102 = vector.load %arg9[%c0_53, %c0_54] : memref<1x1xf32, #tpu.memory_space<vmem>>, vector<1x1xf32>
      %cst_55 = arith.constant 3.906250e-03 : f32
      %103 = vector.broadcast %cst_55 : f32 to vector<1x1xf32>
      %104 = arith.mulf %102, %103 : vector<1x1xf32>
      %c0_56 = arith.constant 0 : index
      %c0_57 = arith.constant 0 : index
      %105 = vector.load %arg10[%c0_56, %c0_57] : memref<1x1xf32, #tpu.memory_space<vmem>>, vector<1x1xf32>
      %106 = math.rsqrt %105 : vector<1x1xf32>
      %107 = arith.mulf %104, %106 : vector<1x1xf32>
      %108 = math.absf %4 : vector<8x32xf32>
      %109 = vector.shape_cast %108 : vector<8x32xf32> to vector<1x8x32xf32>
      %cst_58 = arith.constant dense<0.000000e+00> : vector<1xf32>
      %110 = vector.multi_reduction <add>, %109, %cst_58 [1, 2] : vector<1x8x32xf32> to vector<1xf32>
      %111 = vector.shape_cast %110 : vector<1xf32> to vector<1x1x1xf32>
      %112 = vector.extract %111[0, 0, 0] : f32 from vector<1x1x1xf32>
      %113 = vector.broadcast %112 : f32 to vector<1x1xf32>
      %cst_59 = arith.constant 3.906250e-03 : f32
      %114 = vector.broadcast %cst_59 : f32 to vector<1x1xf32>
      %115 = arith.mulf %113, %114 : vector<1x1xf32>
      %116 = arith.mulf %4, %4 : vector<8x32xf32>
      %117 = vector.shape_cast %116 : vector<8x32xf32> to vector<1x8x32xf32>
      %cst_60 = arith.constant dense<0.000000e+00> : vector<1xf32>
      %118 = vector.multi_reduction <add>, %117, %cst_60 [1, 2] : vector<1x8x32xf32> to vector<1xf32>
      %119 = vector.shape_cast %118 : vector<1xf32> to vector<1x1x1xf32>
      %120 = vector.extract %119[0, 0, 0] : f32 from vector<1x1x1xf32>
      %121 = vector.broadcast %120 : f32 to vector<1x1xf32>
      %122 = math.rsqrt %121 : vector<1x1xf32>
      %123 = arith.mulf %115, %122 : vector<1x1xf32>
      %124 = arith.addf %101, %107 : vector<1x1xf32>
      %125 = arith.addf %124, %123 : vector<1x1xf32>
      %c0_61 = arith.constant 0 : index
      %c0_62 = arith.constant 0 : index
      %126 = vector.load %arg4[%c0_61, %c0_62] : memref<1x1xf32, #tpu.memory_space<vmem>>, vector<1x1xf32>
      tpu.vector_store %arg4[%c0_61, %c0_62], %125 {strides = array<i32>} : memref<1x1xf32, #tpu.memory_space<vmem>>, vector<1x1xf32>,
    } else {
    }
    return
  }
  func.func @transform_0(%arg0: i32) -> i32 {
    %c0_i32 = arith.constant 0 : i32
    %c0_i32_0 = arith.constant 0 : i32
    return %c0_i32 : i32
  }
  func.func @transform_1(%arg0: i32) -> (i32, i32) {
    %c0_i32 = arith.constant 0 : i32
    %c0_i32_0 = arith.constant 0 : i32
    return %arg0, %c0_i32 : i32, i32
  }
  func.func @transform_2(%arg0: i32) -> (i32, i32) {
    %c0_i32 = arith.constant 0 : i32
    %c0_i32_0 = arith.constant 0 : i32
    %c0_i32_1 = arith.constant 0 : i32
    return %c0_i32, %c0_i32_0 : i32, i32
  }
  func.func @transform_3(%arg0: i32) -> (i32, i32) {
    %c0_i32 = arith.constant 0 : i32
    %c0_i32_0 = arith.constant 0 : i32
    %c0_i32_1 = arith.constant 0 : i32
    return %c0_i32, %c0_i32_0 : i32, i32
  }
}

</mosaic_0001>

<llo_original>
// kernel: tpu_custom_call.1
$region0: #{tpu_custom_call.1}
  #allocation0 [shape = 'u32[]', space=smem, size = 0x4, offset = 0x4, fixed_abs, tag = 'smem constant byte address 0x4 - core index']
  #allocation1 [shape = 'u32[144,128]{1,0:T(1,128)}', space=vmem, size = 0x12000, scoped, tag = 'internal scratch']
  #allocation2 [shape = 'f32[1,8]{1,0:T(1,128)}', space=vmem, size = 0x200, scoped, tag = 'scratch operand']
  #allocation3 [shape = 'f32[1,8]{1,0:T(1,128)}', space=vmem, size = 0x200, scoped, tag = 'scratch operand']
  #allocation4 [shape = 'f32[1,1]{1,0:T(1,128)}', space=vmem, size = 0x200, scoped, tag = 'scratch operand']
  #allocation5 [shape = 'f32[1,1]{1,0:T(1,128)}', space=vmem, size = 0x200, scoped, tag = 'scratch operand']
  #allocation6 [shape = 'f32[1,1]{1,0:T(1,128)}', space=vmem, size = 0x200, scoped, tag = 'scratch operand']
  #allocation7 [shape = 'f32[1,1]{1,0:T(1,128)}', space=vmem, size = 0x200, scoped, tag = 'scratch operand']
  #allocation8 [shape = 'f32[1]{0:T(128)S(6)}', space=smem, size = 0x200, scoped, tag = 'scoped memory for tpu_custom_call.1']
  %s0 = inlined_call_operand.<no memory space> [shape: f32[1], index: 0, kind: input, shape index: {}]
  %s1 = inlined_call_operand.hbm [shape: f32[8,32], index: 1, kind: input, shape index: {}]
  %s2 = inlined_call_operand.hbm [shape: f32[8,32], index: 2, kind: input, shape index: {}]
  %s3 = inlined_call_operand.hbm [shape: f32[1,1], index: 3, kind: output, shape index: {}]
  %s4 = sld [smem:[#allocation0]]
  $region38: #{tpu_custom_call.1} parent=0
    _
  %s6 = ssub.s32 1, %s4
  %s7 = scalar_select 0, %s6, %s4
  %8 = sst [smem:[#allocation8]] %s0
  $region1: #{tpu_custom_call.1} parent=0
    #allocation9 [shape = 'u8[4096]{0}', space=vmem, size = 0x1000, scoped, tag = 'input window, operand 1, single buffered']
    #allocation10 [shape = 's32[1]{0}', space=sflag, size = 0x4, scoped, tag = 'scoped memory for tpu_custom_call.1']
    #allocation11 [shape = 's32[1]{0}', space=sflag, size = 0x4, scoped, tag = 'scoped memory for tpu_custom_call.1']
    #allocation12 [shape = 'u8[4096]{0}', space=vmem, size = 0x1000, scoped, tag = 'input window, operand 2, single buffered']
    #allocation13 [shape = 's32[1]{0}', space=sflag, size = 0x4, scoped, tag = 'scoped memory for tpu_custom_call.1']
    #allocation14 [shape = 'u8[512]{0}', space=vmem, size = 0x400, scoped, tag = 'output window, operand 0, single buffered']
    %9 = vsyncpa [#allocation10], 0
    %10 = vsyncpa [#allocation13], 0
    %11 = vsyncpa [#allocation11], 0
    // Predicated region
    $region2: #{tpu_custom_call.1} parent=1 // pred_check
      _
    $region3: #{tpu_custom_call.1} parent=1 // pred_check_branch
      %13 = sbr.rel (0) target = $region5
    $region4: #{tpu_custom_call.1} parent=1 // pred_region
      _
    $region5: #{tpu_custom_call.1} parent=1 // pred_fallthru
      _
    // Predicated region
    $region6: #{tpu_custom_call.1} parent=1 // pred_check
      _
    $region7: #{tpu_custom_call.1} parent=1 // pred_check_branch
      %15 = sbr.rel (0) target = $region9
    $region8: #{tpu_custom_call.1} parent=1 // pred_region
      %s17 = ssub.s32 128, 128
      %18 = vsyncadd [#allocation10], %s17
      %s20 = sshll.u32 [#allocation9], 4
      %s21 = int_to_ptr.vmem [resolvable:$true] %s20
      %23 = dma.hbm_to_vmem [thread:$0]  %s1, 128, %s21, [#allocation10]
    $region9: #{tpu_custom_call.1} parent=1 // pred_fallthru
      _
    // Predicated region
    $region10: #{tpu_custom_call.1} parent=1 // pred_check
      _
    $region11: #{tpu_custom_call.1} parent=1 // pred_check_branch
      %25 = sbr.rel (0) target = $region13
    $region12: #{tpu_custom_call.1} parent=1 // pred_region
      %s27 = ssub.s32 128, 128
      %28 = vsyncadd [#allocation13], %s27
      %s30 = sshll.u32 [#allocation12], 4
      %s31 = int_to_ptr.vmem [resolvable:$true] %s30
      %33 = dma.hbm_to_vmem [thread:$0]  %s2, 128, %s31, [#allocation13]
    $region13: #{tpu_custom_call.1} parent=1 // pred_fallthru
      _
    // Predicated region
    $region14: #{tpu_custom_call.1} parent=1 // pred_check
      _
    $region15: #{tpu_custom_call.1} parent=1 // pred_check_branch
      %35 = sbr.rel (0) target = $region17
    $region16: #{tpu_custom_call.1} parent=1 // pred_region
      %36 = dma.done [#allocation10], 128
    $region17: #{tpu_custom_call.1} parent=1 // pred_fallthru
      _
    // Predicated region
    $region18: #{tpu_custom_call.1} parent=1 // pred_check
      _
    $region19: #{tpu_custom_call.1} parent=1 // pred_check_branch
      %38 = sbr.rel (0) target = $region21
    $region20: #{tpu_custom_call.1} parent=1 // pred_region
      %39 = dma.done [#allocation13], 128
    $region21: #{tpu_custom_call.1} parent=1 // pred_fallthru
      _
    %p40 = scmp.eq.s32.totalorder 0, 0
    // Predicated region
    $region22: #{tpu_custom_call.1} parent=1 // pred_check
      %p41 = pneg %p40
    $region23: #{tpu_custom_call.1} parent=1 // pred_check_branch
      %43 = sbr.rel (%p41) target = $region25
    $region24: #{tpu_custom_call.1} parent=1 // pred_region
      %vm44 = vcmask 57344
      %45 = vst.msk [vmem:[#allocation2] sm:$0x1] %vm44, -inf
      %46 = vst.msk [vmem:[#allocation3] sm:$0x1] %vm44, 0.0
      %vm47 = vcmask 0
      %48 = vst.msk [vmem:[#allocation4] sm:$0x1] %vm47, 0.0
      %49 = vst.msk [vmem:[#allocation5] sm:$0x1] %vm47, 0.0
      %50 = vst.msk [vmem:[#allocation6] sm:$0x1] %vm47, 0.0
      %51 = vst.msk [vmem:[#allocation7] sm:$0x1] %vm47, 0.0
    $region25: #{tpu_custom_call.1} parent=1 // pred_fallthru
      _
    %v52 = vld [vmem:[#allocation9] sm:$0xff]
    %v53 = vld [vmem:[#allocation12] sm:$0xff]
    %s54 = sld [smem:[#allocation8]]
    %v55 = vstv %s54
    %v56 = vmul.f32 %v55, 1.442695
    %v57 = vpow.pop %v56
    %s58 = vtos %v57
    %vm59 = vcmask 261120
    %v61 = vsel %vm59, %v52, 0
    %v64 = vsel %vm59, %v53, 0
    %66 = vmatprep.subr.mxu0 0.0
    %67 = vmatpush1.xpose.msra.mxu0 0.0
    %68 = vmatprep.subr.mxu0 0.0
    %69 = vmatpush1.xpose.msra.mxu0 0.0
    %70 = vmatprep.subr.mxu0 0.0
    %71 = vmatpush1.xpose.msra.mxu0 0.0
    %72 = vmatprep.subr.mxu0 0.0
    %73 = vmatpush1.xpose.msra.mxu0 0.0
    %74 = vmatprep.subr.mxu0 0.0
    %75 = vmatpush1.xpose.msra.mxu0 0.0
    %76 = vmatprep.subr.mxu0 0.0
    %77 = vmatpush1.xpose.msra.mxu0 0.0
    %78 = vmatprep.subr.mxu0 0.0
    %79 = vmatpush1.xpose.msra.mxu0 0.0
    %80 = vmatprep.subr.mxu0 0.0
    %81 = vmatpush1.xpose.msra.mxu0 0.0
    %82 = vmatprep.subr.mxu0 0.0
    %83 = vmatpush1.xpose.msra.mxu0 0.0
    %84 = vmatprep.subr.mxu0 0.0
    %85 = vmatpush1.xpose.msra.mxu0 0.0
    %86 = vmatprep.subr.mxu0 0.0
    %87 = vmatpush1.xpose.msra.mxu0 0.0
    %88 = vmatprep.subr.mxu0 0.0
    %89 = vmatpush1.xpose.msra.mxu0 0.0
    %90 = vmatprep.subr.mxu0 0.0
    %91 = vmatpush1.xpose.msra.mxu0 0.0
    %92 = vmatprep.subr.mxu0 0.0
    %93 = vmatpush1.xpose.msra.mxu0 0.0
    %94 = vmatprep.subr.mxu0 0.0
    %95 = vmatpush1.xpose.msra.mxu0 0.0
    %96 = vmatprep.subr.mxu0 0.0
    %97 = vmatpush1.xpose.msra.mxu0 %v64
    %98 = vmatprep.subr.mxu0 0.0
    %99 = vmatpush2.xpose.msra.mxu0 0.0
    %100 = vmatprep.subr.mxu0 0.0
    %101 = vmatpush2.xpose.msra.mxu0 0.0
    %102 = vmatprep.subr.mxu0 0.0
    %103 = vmatpush2.xpose.msra.mxu0 0.0
    %104 = vmatprep.subr.mxu0 0.0
    %105 = vmatpush2.xpose.msra.mxu0 0.0
    %106 = vmatprep.subr.mxu0 0.0
    %107 = vmatpush2.xpose.msra.mxu0 0.0
    %108 = vmatprep.subr.mxu0 0.0
    %109 = vmatpush2.xpose.msra.mxu0 0.0
    %110 = vmatprep.subr.mxu0 0.0
    %111 = vmatpush2.xpose.msra.mxu0 0.0
    %112 = vmatprep.subr.mxu0 0.0
    %113 = vmatpush2.xpose.msra.mxu0 0.0
    %114 = vmatprep.subr.mxu0 0.0
    %115 = vmatpush2.xpose.msra.mxu0 0.0
    %116 = vmatprep.subr.mxu0 0.0
    %117 = vmatpush2.xpose.msra.mxu0 0.0
    %118 = vmatprep.subr.mxu0 0.0
    %119 = vmatpush2.xpose.msra.mxu0 0.0
    %120 = vmatprep.subr.mxu0 0.0
    %121 = vmatpush2.xpose.msra.mxu0 0.0
    %122 = vmatprep.subr.mxu0 0.0
    %123 = vmatpush2.xpose.msra.mxu0 0.0
    %124 = vmatprep.subr.mxu0 0.0
    %125 = vmatpush2.xpose.msra.mxu0 0.0
    %126 = vmatprep.subr.mxu0 0.0
    %127 = vmatpush2.xpose.msra.mxu0 0.0
    %128 = vmatprep.subr.mxu0 0.0
    %129 = vmatpush2.xpose.msra.mxu0 0.0
    %130 = vmatprep.mubr.f32.mxu0 0.0
    %131 = vmatmul.mubr.f32.gmra.mxu0 %v61
    %v132 = vpop.f32.mrf.mxu0
    %v133 = vadd.f32 0.0, %v132
    %v134 = vpop.f32.mrf.mxu0
    %135 = vdwg.mxu0
    %v136 = vstv %s58
    %v137 = vmul.f32 %v136, %v133
    %vm138 = vcmask 64512
    %v139 = vsel %vm138, %v137, -inf
    %140 = vmax.xlane.f32.xlu0 %v139
    %v141 = vpop.xlane.xlu0 %140
    %v142 = vsub.f32 %v137, %v141
    %v143 = vmul.f32 %v142, 1.442695
    %v144 = vpow.pop %v143
    %v145 = vsel %vm138, %v144, 0.0
    %146 = vadd.xlane.f32.xlu0 %v145
    %v147 = vpop.xlane.xlu0 %146
    %v148 = vlog2.pop %v147
    %v149 = vmul.f32 %v148, 0.6931472
    %v150 = vadd.f32 %v149, %v141
    %s151 = smul.u32 0, 8
    %v152 = vlaneseq
    %v153 = vshrl.u32 %v152, 7
    %v154 = vstv %s151
    %v155 = vadd.s32 %v154, %v153
    %v156 = vlaneseq
    %v157 = vand.u32 %v156, 127
    %vm158 = vcmp.eq.s32.totalorder %v155, %v157
    %v159 = vsel %vm158, %v137, 0.0
    %v160 = vsel %vm138, %v159, 0.0
    %161 = vadd.xlane.f32.xlu0 %v160
    %v162 = vpop.xlane.xlu0 %161
    %v163 = vld [vmem:[#allocation2] sm:$0x1]
    %v164 = vrot.slane %v139, 4
    %v165 = vmax.f32 %v139, %v164
    %v166 = vrot.slane %v165, 2
    %v167 = vmax.f32 %v165, %v166
    %v168 = vrot.slane %v167, 1
    %v169 = vmax.f32 %v167, %v168
    %v170 = vmax.f32 %v163, %v169
    %v171 = vld [vmem:[#allocation3] sm:$0x1]
    %v172 = vsub.f32 %v163, %v170
    %v173 = vmul.f32 %v172, 1.442695
    %v174 = vpow.pop %v173
    %v175 = vmul.f32 %v171, %v174
    %v177 = vlaneseq
    %v178 = vshrl.u32 %v177, 7
    %v179 = vsub.s32 0, %v178
    %v180 = vrot.slane %v170, %v179
    %v182 = vsub.f32 %v137, %v180
    %v183 = vmul.f32 %v182, 1.442695
    %v184 = vpow.pop %v183
    %v185 = vsel %vm138, %v184, 0.0
    %v186 = vrot.slane %v185, 4
    %v187 = vadd.f32 %v185, %v186
    %v188 = vrot.slane %v187, 2
    %v189 = vadd.f32 %v187, %v188
    %v190 = vrot.slane %v189, 1
    %v191 = vadd.f32 %v189, %v190
    %v192 = vadd.f32 %v175, %v191
    %vm193 = vcmask 57344
    %194 = vst.msk [vmem:[#allocation3] sm:$0x1] %vm193, %v192
    %195 = vst.msk [vmem:[#allocation2] sm:$0x1] %vm193, %v170
    %v196 = vld [vmem:[#allocation4] sm:$0x1]
    %vm197 = vcmask 7168
    %v198 = vsel %vm197, %v150, 0.0
    %199 = vadd.xlane.f32.xlu0 %v198
    %v200 = vpop.xlane.xlu0 %199
    %v201 = vrot.slane %v200, 4
    %v202 = vadd.f32 %v200, %v201
    %v203 = vrot.slane %v202, 2
    %v204 = vadd.f32 %v202, %v203
    %v205 = vrot.slane %v204, 1
    %v206 = vadd.f32 %v204, %v205
    %s207 = vtos %v206
    %v208 = vstv %s207
    %v209 = vadd.f32 %v196, %v208
    %vm210 = vcmask 0
    %211 = vst.msk [vmem:[#allocation4] sm:$0x1] %vm210, %v209
    %v212 = vld [vmem:[#allocation5] sm:$0x1]
    %v213 = vsel %vm197, %v162, 0.0
    %214 = vadd.xlane.f32.xlu0 %v213
    %v215 = vpop.xlane.xlu0 %214
    %v216 = vrot.slane %v215, 4
    %v217 = vadd.f32 %v215, %v216
    %v218 = vrot.slane %v217, 2
    %v219 = vadd.f32 %v217, %v218
    %v220 = vrot.slane %v219, 1
    %v221 = vadd.f32 %v219, %v220
    %s222 = vtos %v221
    %v223 = vstv %s222
    %v224 = vadd.f32 %v212, %v223
    %225 = vst.msk [vmem:[#allocation5] sm:$0x1] %vm210, %v224
    %v226 = vld [vmem:[#allocation6] sm:$0x1]
    %v227 = vand.u32 2147483647, %v52
    %v228 = vsel %vm59, %v227, 0.0
    %229 = vadd.xlane.f32.xlu0 %v228
    %v230 = vpop.xlane.xlu0 %229
    %v231 = vrot.slane %v230, 4
    %v232 = vadd.f32 %v230, %v231
    %v233 = vrot.slane %v232, 2
    %v234 = vadd.f32 %v232, %v233
    %v235 = vrot.slane %v234, 1
    %v236 = vadd.f32 %v234, %v235
    %s237 = vtos %v236
    %v238 = vstv %s237
    %v239 = vadd.f32 %v226, %v238
    %240 = vst.msk [vmem:[#allocation6] sm:$0x1] %vm210, %v239
    %v241 = vld [vmem:[#allocation7] sm:$0x1]
    %v242 = vmul.f32 %v52, %v52
    %v243 = vsel %vm59, %v242, 0.0
    %244 = vadd.xlane.f32.xlu0 %v243
    %v245 = vpop.xlane.xlu0 %244
    %v246 = vrot.slane %v245, 4
    %v247 = vadd.f32 %v245, %v246
    %v248 = vrot.slane %v247, 2
    %v249 = vadd.f32 %v247, %v248
    %v250 = vrot.slane %v249, 1
    %v251 = vadd.f32 %v249, %v250
    %s252 = vtos %v251
    %v253 = vstv %s252
    %v254 = vadd.f32 %v241, %v253
    %255 = vst.msk [vmem:[#allocation7] sm:$0x1] %vm210, %v254
    // Predicated region
    $region26: #{tpu_custom_call.1} parent=1 // pred_check
      %p256 = pneg %p40
    $region27: #{tpu_custom_call.1} parent=1 // pred_check_branch
      %258 = sbr.rel (%p256) target = $region29
    $region28: #{tpu_custom_call.1} parent=1 // pred_region
      %v259 = vld [vmem:[#allocation3] sm:$0x1]
      %v260 = vlog2.pop %v259
      %v261 = vmul.f32 %v260, 0.6931472
      %v262 = vld [vmem:[#allocation2] sm:$0x1]
      %v263 = vadd.f32 %v261, %v262
      %v264 = vld [vmem:[#allocation5] sm:$0x1]
      %v265 = vld [vmem:[#allocation4] sm:$0x1]
      %v266 = vsub.f32 %v265, %v264
      %v267 = vmul.f32 %v266, 0.125
      %v268 = vsel %vm193, %v263, 0.0
      %269 = vadd.xlane.f32.xlu0 %v268
      %v270 = vpop.xlane.xlu0 %269
      %v271 = vrot.slane %v270, 4
      %v272 = vadd.f32 %v270, %v271
      %v273 = vrot.slane %v272, 2
      %v274 = vadd.f32 %v272, %v273
      %v275 = vrot.slane %v274, 1
      %v276 = vadd.f32 %v274, %v275
      %s277 = vtos %v276
      %v278 = vstv %s277
      %v279 = vsub.f32 %v278, %v264
      %v280 = vmul.f32 %v279, 0.125
      %v281 = vadd.f32 %v267, %v280
      %v282 = vmul.f32 %v281, 0.5
      %v283 = vld [vmem:[#allocation6] sm:$0x1]
      %v284 = vmul.f32 %v283, 0.00390625
      %v285 = vld [vmem:[#allocation7] sm:$0x1]
      %v286 = vrsqrt.pop %v285
      %v287 = vmul.f32 %v284, %v286
      %v288 = vand.u32 2147483647, %v53
      %v289 = vsel %vm59, %v288, 0.0
      %290 = vadd.xlane.f32.xlu0 %v289
      %v291 = vpop.xlane.xlu0 %290
      %v292 = vrot.slane %v291, 4
      %v293 = vadd.f32 %v291, %v292
      %v294 = vrot.slane %v293, 2
      %v295 = vadd.f32 %v293, %v294
      %v296 = vrot.slane %v295, 1
      %v297 = vadd.f32 %v295, %v296
      %s298 = vtos %v297
      %v299 = vstv %s298
      %v300 = vmul.f32 %v299, 0.00390625
      %v301 = vmul.f32 %v53, %v53
      %v302 = vsel %vm59, %v301, 0.0
      %303 = vadd.xlane.f32.xlu0 %v302
      %v304 = vpop.xlane.xlu0 %303
      %v305 = vrot.slane %v304, 4
      %v306 = vadd.f32 %v304, %v305
      %v307 = vrot.slane %v306, 2
      %v308 = vadd.f32 %v306, %v307
      %v309 = vrot.slane %v308, 1
      %v310 = vadd.f32 %v308, %v309
      %s311 = vtos %v310
      %v312 = vstv %s311
      %v313 = vrsqrt.pop %v312
      %v314 = vmul.f32 %v300, %v313
      %v315 = vadd.f32 %v282, %v287
      %v316 = vadd.f32 %v315, %v314
      %317 = vst.msk [vmem:[#allocation14] sm:$0x1] %vm210, %v316
    $region29: #{tpu_custom_call.1} parent=1 // pred_fallthru
      _
    // Predicated region
    $region30: #{tpu_custom_call.1} parent=1 // pred_check
      _
    $region31: #{tpu_custom_call.1} parent=1 // pred_check_branch
      %319 = sbr.rel (0) target = $region33
    $region32: #{tpu_custom_call.1} parent=1 // pred_region
      %s321 = ssub.s32 16, 16
      %322 = vsyncadd [#allocation11], %s321
      %s324 = sshll.u32 [#allocation14], 4
      %s325 = int_to_ptr.vmem [resolvable:$true] %s324
      %327 = dma.vmem_to_hbm [thread:$0]  %s325, 16, %s3, [#allocation11]
    $region33: #{tpu_custom_call.1} parent=1 // pred_fallthru
      _
    // Predicated region
    $region34: #{tpu_custom_call.1} parent=1 // pred_check
      _
    $region35: #{tpu_custom_call.1} parent=1 // pred_check_branch
      %329 = sbr.rel (0) target = $region37
    $region36: #{tpu_custom_call.1} parent=1 // pred_region
      %330 = dma.done [#allocation11], 16
    $region37: #{tpu_custom_call.1} parent=1 // pred_fallthru
      _
    %331 = vsyncpa [#allocation10], 1
    %332 = vsyncpa [#allocation13], 1
    %333 = vsyncpa [#allocation11], 1

</llo_original>
